<compile_context>
chip_gen: v7x
topology: tpu7x:2x2x1
jax: 0.10.0
libtpu: 0.0.40
codegen_flags: <defaults>
</compile_context>

<pallas_src>
import jax
import jax.numpy as jnp
from jax.experimental import pallas as pl
from jax.experimental.pallas import tpu as pltpu

SUBLANE = 8


def _round_up(x, m):
    return (x + m - 1) // m * m


def _cdiv(a, b):
    return -(-a // b)


def _fused_heads_kernel(z_ref, w_ref, b_ref, out_ref):
    # z:   [tile_b, Z]     as produced upstream (f32 or bf16), unpadded
    # w:   [Z, Nout]       same dtype as z (actor cols | value col | zero pad)
    # b:   [1, Nout]       f32
    # out: [tile_b, Nout]  f32
    out_ref[...] = (
        jnp.dot(z_ref[...], w_ref[...], preferred_element_type=jnp.float32)
        + b_ref[...]
    )


def fused_actor_critic_heads(z, w_fused, b_fused, num_actions, *,
                             tile_b=2048,
                             vmem_budget_bytes=24 * 1024 * 1024,
                             z_buffers=2):
    """Fused [actor logits | value] head: one matmul per batch tile.

    Returns (logits[B, A], value[B, 1]) in float32.
    """
    B, Z = z.shape
    Zw, nout = w_fused.shape
    assert Zw == Z, "weight contracting dim must match z"
    assert nout % SUBLANE == 0 and nout >= num_actions + 1

    if w_fused.dtype != z.dtype:
        # Tiny [Z, Nout] cast; ActorCriticPallas caches this per dtype instead.
        w_fused = w_fused.astype(z.dtype)

    itemsize = jnp.dtype(z.dtype).itemsize

    # VMEM sizing: double-buffered z / out tiles plus (conservatively) a
    # double-buffered weight+bias pair, against an explicitly granted budget.
    per_row_bytes = 2 * Z * itemsize + 2 * nout * 4
    weight_bytes = 2 * (Z * nout * itemsize + nout * 4)
    max_rows = (vmem_budget_bytes - weight_bytes) // per_row_bytes
    max_rows = max(SUBLANE, (max_rows // SUBLANE) * SUBLANE)

    tile_b = min(tile_b, max_rows)
    if B > 2 * SUBLANE:
        # Keep >= 2 grid steps so the "parallel" batch axis can shard across
        # both v7x TensorCores (no effect on single-TC v5e/v6e).
        tile_b = min(tile_b, _round_up(_cdiv(B, 2), SUBLANE))
    tile_b = min(tile_b, _round_up(B, SUBLANE))
    tile_b = max(SUBLANE, _round_up(tile_b, SUBLANE))

    grid = (_cdiv(B, tile_b),)

    z_spec_kwargs = {}
    if z_buffers != 2:
        # Deeper input pipelining if profiling shows exposed DMA on the z stream.
        z_spec_kwargs["pipeline_mode"] = pl.Buffered(z_buffers)

    cost = pl.CostEstimate(
        flops=2 * B * Z * nout,
        transcendentals=0,
        bytes_accessed=B * Z * itemsize + Z * nout * itemsize + B * nout * 4,
    )

    out = pl.pallas_call(
        _fused_heads_kernel,
        out_shape=jax.ShapeDtypeStruct((B, nout), jnp.float32),
        grid=grid,
        in_specs=[
            pl.BlockSpec((tile_b, Z), lambda i: (i, 0), **z_spec_kwargs),  # streamed
            pl.BlockSpec((Z, nout), lambda i: (0, 0)),   # weights resident in VMEM
            pl.BlockSpec((1, nout), lambda i: (0, 0)),   # bias resident in VMEM
        ],
        out_specs=pl.BlockSpec((tile_b, nout), lambda i: (i, 0)),
        compiler_params=pltpu.CompilerParams(
            dimension_semantics=("parallel",),
            vmem_limit_bytes=vmem_budget_bytes),
        cost_estimate=cost,
    )(z, w_fused, b_fused)

    logits = out[:, :num_actions]
    value = out[:, num_actions:num_actions + 1]
    return logits, value


class ActorCriticPallas:
    """JAX/Pallas re-implementation of the ActorCritic heads.

    forward(z) -> (logits, actor_logstd, value)   if not discrete
               -> (logits, value)                 if discrete
    """

    def __init__(self, input_shape, num_actions, discrete, key, tile_b=2048):
        self.discrete = discrete
        self.num_actions = num_actions
        self.tile_b = tile_b

        k_a, k_c = jax.random.split(key)
        # PyTorch layer_init: orthogonal_(weight, gain), constant_(bias, 0).
        ortho = jax.nn.initializers.orthogonal
        wa_torch = ortho(scale=0.01)(k_a, (num_actions, input_shape), jnp.float32)  # [A, Z]
        wc_torch = ortho(scale=1.0)(k_c, (1, input_shape), jnp.float32)             # [1, Z]

        # [in, out] layouts (kept in f32 for reference checking).
        self.wa = jnp.asarray(wa_torch.T)                       # [Z, A]
        self.ba = jnp.zeros((1, num_actions), jnp.float32)      # [1, A]
        self.wc = jnp.asarray(wc_torch.T)                       # [Z, 1]
        self.bc = jnp.zeros((1, 1), jnp.float32)                # [1, 1]

        # Fused parameters: columns [0:A] -> actor logits, column [A] -> value,
        # columns [A+1:Nout] -> zero pad to the next sublane multiple (8).
        nout = _round_up(num_actions + 1, SUBLANE)
        pad = nout - (num_actions + 1)
        w = jnp.concatenate([self.wa, self.wc], axis=1)          # [Z, A+1]
        b = jnp.concatenate([self.ba, self.bc], axis=1)          # [1, A+1]
        w_f32 = jnp.pad(w, ((0, 0), (0, pad)))                   # [Z, Nout]
        self.b_fused = jnp.pad(b, ((0, 0), (0, pad)))            # [1, Nout]
        # Fused weights cached per compute dtype (casts hoisted out of forward()).
        self._w_by_dtype = {jnp.dtype(jnp.float32): w_f32}

        if discrete:
            self.actor_logstd = None
        else:
            self.actor_logstd = jnp.zeros((1, num_actions), jnp.float32)

    @property
    def w_fused(self):
        return self._w_by_dtype[jnp.dtype(jnp.float32)]

    def _weights_for(self, dtype):
        key = jnp.dtype(dtype)
        if key not in self._w_by_dtype:
            self._w_by_dtype[key] = self.w_fused.astype(key)
        return self._w_by_dtype[key]

    def forward(self, z):
        # z: [B, input_shape] latent from the fusion encoder, consumed in the
        # dtype it was produced in (never cast here -> no extra HBM pass).
        w = self._weights_for(z.dtype)
        logits, value = fused_actor_critic_heads(
            z, w, self.b_fused, self.num_actions, tile_b=self.tile_b)
        if self.discrete:
            return logits, value
        return logits, self.actor_logstd, value


if __name__ == "__main__":
    key = jax.random.PRNGKey(0)
    k_param, k_z1, k_z2 = jax.random.split(key, 3)

    Z = 32   # input_shape (latent dim from the fusion encoder)
    A = 4    # num_actions

    model = ActorCriticPallas(input_shape=Z, num_actions=A, discrete=False, key=k_param)

    # ---- test 1: tiny batch, f32, continuous action head ----
    B1 = 8
    z1 = jax.random.normal(k_z1, (B1, Z), dtype=jnp.float32)
    logits, actor_logstd, value = model.forward(z1)
    jax.block_until_ready((logits, actor_logstd, value))

    ref_logits = z1 @ model.wa + model.ba
    ref_value = z1 @ model.wc + model.bc
    assert logits.shape == (B1, A) and value.shape == (B1, 1)
    assert actor_logstd.shape == (1, A)
    assert jnp.allclose(logits, ref_logits, atol=1e-5, rtol=1e-5)
    assert jnp.allclose(value, ref_value, atol=1e-5, rtol=1e-5)

    # ---- test 2: batch not a tile multiple (partial trailing block, 4 grid steps) ----
    B2 = 200
    z2 = jax.random.normal(k_z2, (B2, Z), dtype=jnp.float32)
    logits2, value2 = fused_actor_critic_heads(
        z2, model.w_fused, model.b_fused, A, tile_b=64)
    jax.block_until_ready((logits2, value2))
    assert logits2.shape == (B2, A) and value2.shape == (B2, 1)
    assert jnp.allclose(logits2, z2 @ model.wa + model.ba, atol=1e-5, rtol=1e-5)
    assert jnp.allclose(value2, z2 @ model.wc + model.bc, atol=1e-5, rtol=1e-5)

    # ---- test 3: default tile_b path (clamp forces >=2 grid steps for v7x dual-TC) ----
    logits3, _, value3 = model.forward(z2)
    jax.block_until_ready((logits3, value3))
    assert jnp.allclose(logits3, z2 @ model.wa + model.ba, atol=1e-5, rtol=1e-5)
    assert jnp.allclose(value3, z2 @ model.wc + model.bc, atol=1e-5, rtol=1e-5)

    # ---- test 4: bf16 z produced upstream (no wrapper cast; per-dtype weight cache) ----
    z_bf16 = z2.astype(jnp.bfloat16)
    logits4, _, value4 = model.forward(z_bf16)
    jax.block_until_ready((logits4, value4))
    ref_l4 = z_bf16.astype(jnp.float32) @ model.wa + model.ba
    ref_v4 = z_bf16.astype(jnp.float32) @ model.wc + model.bc
    assert jnp.allclose(logits4, ref_l4, atol=5e-2, rtol=5e-2)
    assert jnp.allclose(value4, ref_v4, atol=5e-2, rtol=5e-2)

    print("KERNEL_OK")
</pallas_src>

<mosaic_0001>
module attributes {stable_mosaic.version = 11 : i64} {
  func.func @_fused_heads_kernel(%arg0: i32, %arg1: memref<8x32xf32, #tpu.memory_space<vmem>>, %arg2: memref<32x8xf32, #tpu.memory_space<vmem>>, %arg3: memref<1x8xf32, #tpu.memory_space<vmem>>, %arg4: memref<8x8xf32, #tpu.memory_space<vmem>>) attributes {dimension_semantics = [#tpu.dimension_semantics<parallel>], iteration_bounds = array<i64: 1>, scalar_prefetch = 0 : i64, scratch_operands = 0 : i64, tpu.core_type = #tpu.core_type<tc>, window_params = [{transform_indices = @transform_0, window_bounds = array<i64: 8, 32>}, {pipeline_mode = #tpu.pipeline_mode<synchronous>, transform_indices = @transform_1, window_bounds = array<i64: 32, 8>}, {pipeline_mode = #tpu.pipeline_mode<synchronous>, transform_indices = @transform_2, window_bounds = array<i64: 1, 8>}, {transform_indices = @transform_3, window_bounds = array<i64: 8, 8>}]} {
    %c0 = arith.constant 0 : index
    %c0_0 = arith.constant 0 : index
    %0 = vector.load %arg1[%c0, %c0_0] : memref<8x32xf32, #tpu.memory_space<vmem>>, vector<8x32xf32>
    %c0_1 = arith.constant 0 : index
    %c0_2 = arith.constant 0 : index
    %1 = vector.load %arg2[%c0_1, %c0_2] : memref<32x8xf32, #tpu.memory_space<vmem>>, vector<32x8xf32>
    %cst = arith.constant dense<0.000000e+00> : vector<8x8xf32>
    %2 = tpu.matmul %0, %1, %cst {dimension_numbers = #tpu.dot_dimension_numbers<[1], [0], [0], [1], [0, 0, 1, 1], [], []>} : vector<8x32xf32>, vector<32x8xf32>, vector<8x8xf32> -> vector<8x8xf32>
    %c0_3 = arith.constant 0 : index
    %c0_4 = arith.constant 0 : index
    %3 = vector.load %arg3[%c0_3, %c0_4] : memref<1x8xf32, #tpu.memory_space<vmem>>, vector<1x8xf32>
    %4 = vector.broadcast %3 : vector<1x8xf32> to vector<8x8xf32>
    %5 = arith.addf %2, %4 : vector<8x8xf32>
    %c0_5 = arith.constant 0 : index
    %c0_6 = arith.constant 0 : index
    %6 = vector.load %arg4[%c0_5, %c0_6] : memref<8x8xf32, #tpu.memory_space<vmem>>, vector<8x8xf32>
    tpu.vector_store %arg4[%c0_5, %c0_6], %5 {strides = array<i32>} : memref<8x8xf32, #tpu.memory_space<vmem>>, vector<8x8xf32>,
    return
  }
  func.func @transform_0(%arg0: i32) -> (i32, i32) {
    %c0_i32 = arith.constant 0 : i32
    %c0_i32_0 = arith.constant 0 : i32
    return %arg0, %c0_i32 : i32, i32
  }
  func.func @transform_1(%arg0: i32) -> (i32, i32) {
    %c0_i32 = arith.constant 0 : i32
    %c0_i32_0 = arith.constant 0 : i32
    %c0_i32_1 = arith.constant 0 : i32
    return %c0_i32, %c0_i32_0 : i32, i32
  }
  func.func @transform_2(%arg0: i32) -> (i32, i32) {
    %c0_i32 = arith.constant 0 : i32
    %c0_i32_0 = arith.constant 0 : i32
    %c0_i32_1 = arith.constant 0 : i32
    return %c0_i32, %c0_i32_0 : i32, i32
  }
  func.func @transform_3(%arg0: i32) -> (i32, i32) {
    %c0_i32 = arith.constant 0 : i32
    %c0_i32_0 = arith.constant 0 : i32
    return %arg0, %c0_i32 : i32, i32
  }
}

</mosaic_0001>

<llo_original>
// kernel: tpu_custom_call.1
$region0: #{tpu_custom_call.1}
  #allocation0 [shape = 'u32[]', space=smem, size = 0x4, offset = 0x4, fixed_abs, tag = 'smem constant byte address 0x4 - core index']
  #allocation1 [shape = 'u32[144,128]{1,0:T(1,128)}', space=vmem, size = 0x12000, scoped, tag = 'internal scratch']
  %s0 = inlined_call_operand.vmem [shape: f32[8,32], index: 0, kind: input, shape index: {}]
  %s1 = inlined_call_operand.vmem [shape: f32[32,8], index: 1, kind: input, shape index: {}]
  %s2 = inlined_call_operand.vmem [shape: f32[1,8], index: 2, kind: input, shape index: {}]
  %s3 = inlined_call_operand.hbm [shape: f32[8,8], index: 3, kind: output, shape index: {}]
  %s4 = sld [smem:[#allocation0]]
  $region22: #{tpu_custom_call.1} parent=0
    _
  %s6 = ssub.s32 1, %s4
  %s7 = scalar_select 0, %s6, %s4
  $region1: #{tpu_custom_call.1} parent=0
    #allocation2 [shape = 'u8[4096]{0}', space=vmem, size = 0x1000, scoped, tag = 'output window, operand 0, single buffered']
    #allocation3 [shape = 's32[1]{0}', space=sflag, size = 0x4, scoped, tag = 'scoped memory for tpu_custom_call.1']
    %8 = vsyncpa [#allocation3], 0
    // Predicated region
    $region2: #{tpu_custom_call.1} parent=1 // pred_check
      _
    $region3: #{tpu_custom_call.1} parent=1 // pred_check_branch
      %10 = sbr.rel (0) target = $region5
    $region4: #{tpu_custom_call.1} parent=1 // pred_region
      _
    $region5: #{tpu_custom_call.1} parent=1 // pred_fallthru
      _
    // Predicated region
    $region6: #{tpu_custom_call.1} parent=1 // pred_check
      _
    $region7: #{tpu_custom_call.1} parent=1 // pred_check_branch
      %12 = sbr.rel (0) target = $region9
    $region8: #{tpu_custom_call.1} parent=1 // pred_region
      _
    $region9: #{tpu_custom_call.1} parent=1 // pred_fallthru
      _
    // Predicated region
    $region10: #{tpu_custom_call.1} parent=1 // pred_check
      _
    $region11: #{tpu_custom_call.1} parent=1 // pred_check_branch
      %14 = sbr.rel (0) target = $region13
    $region12: #{tpu_custom_call.1} parent=1 // pred_region
      _
    $region13: #{tpu_custom_call.1} parent=1 // pred_fallthru
      _
    %v15 = vld [vmem:[%s0] sm:$0xff]
    %v16 = vld [vmem:[%s1] sm:$0xff]
    %v17 = vld [vmem:[%s1 + $0x8] sm:$0xff]
    %v18 = vld [vmem:[%s1 + $0x10] sm:$0xff]
    %v19 = vld [vmem:[%s1 + $0x18] sm:$0xff]
    %v20 = vld [vmem:[%s2] sm:$0x1]
    %v22 = vlaneseq
    %v23 = vshrl.u32 %v22, 7
    %v24 = vsub.s32 0, %v23
    %v25 = vrot.slane %v20, %v24
    %vm27 = vcmask 261120
    %v29 = vsel %vm27, %v15, 0
    %31 = vmatprep.subr.mxu0 0.0
    %32 = vmatpush1.msra.mxu0 %v16
    %33 = vmatprep.subr.mxu0 0.0
    %34 = vmatpush1.msra.mxu0 %v17
    %35 = vmatprep.subr.mxu0 0.0
    %36 = vmatpush1.msra.mxu0 %v18
    %37 = vmatprep.subr.mxu0 0.0
    %38 = vmatpush1.msra.mxu0 %v19
    %39 = vmatprep.subr.mxu0 0.0
    %40 = vmatpush1.msra.mxu0 0.0
    %41 = vmatprep.subr.mxu0 0.0
    %42 = vmatpush1.msra.mxu0 0.0
    %43 = vmatprep.subr.mxu0 0.0
    %44 = vmatpush1.msra.mxu0 0.0
    %45 = vmatprep.subr.mxu0 0.0
    %46 = vmatpush1.msra.mxu0 0.0
    %47 = vmatprep.subr.mxu0 0.0
    %48 = vmatpush1.msra.mxu0 0.0
    %49 = vmatprep.subr.mxu0 0.0
    %50 = vmatpush1.msra.mxu0 0.0
    %51 = vmatprep.subr.mxu0 0.0
    %52 = vmatpush1.msra.mxu0 0.0
    %53 = vmatprep.subr.mxu0 0.0
    %54 = vmatpush1.msra.mxu0 0.0
    %55 = vmatprep.subr.mxu0 0.0
    %56 = vmatpush1.msra.mxu0 0.0
    %57 = vmatprep.subr.mxu0 0.0
    %58 = vmatpush1.msra.mxu0 0.0
    %59 = vmatprep.subr.mxu0 0.0
    %60 = vmatpush1.msra.mxu0 0.0
    %61 = vmatprep.subr.mxu0 0.0
    %62 = vmatpush1.msra.mxu0 0.0
    %63 = vmatprep.subr.mxu0 0.0
    %64 = vmatpush1.msra.mxu0 0.0
    %65 = vmatprep.subr.mxu0 0.0
    %66 = vmatpush1.msra.mxu0 0.0
    %67 = vmatprep.subr.mxu0 0.0
    %68 = vmatpush1.msra.mxu0 0.0
    %69 = vmatprep.subr.mxu0 0.0
    %70 = vmatpush1.msra.mxu0 0.0
    %71 = vmatprep.subr.mxu0 0.0
    %72 = vmatpush1.msra.mxu0 0.0
    %73 = vmatprep.subr.mxu0 0.0
    %74 = vmatpush1.msra.mxu0 0.0
    %75 = vmatprep.subr.mxu0 0.0
    %76 = vmatpush1.msra.mxu0 0.0
    %77 = vmatprep.subr.mxu0 0.0
    %78 = vmatpush1.msra.mxu0 0.0
    %79 = vmatprep.subr.mxu0 0.0
    %80 = vmatpush1.msra.mxu0 0.0
    %81 = vmatprep.subr.mxu0 0.0
    %82 = vmatpush1.msra.mxu0 0.0
    %83 = vmatprep.subr.mxu0 0.0
    %84 = vmatpush1.msra.mxu0 0.0
    %85 = vmatprep.subr.mxu0 0.0
    %86 = vmatpush1.msra.mxu0 0.0
    %87 = vmatprep.subr.mxu0 0.0
    %88 = vmatpush1.msra.mxu0 0.0
    %89 = vmatprep.subr.mxu0 0.0
    %90 = vmatpush1.msra.mxu0 0.0
    %91 = vmatprep.subr.mxu0 0.0
    %92 = vmatpush1.msra.mxu0 0.0
    %93 = vmatprep.subr.mxu0 0.0
    %94 = vmatpush1.msra.mxu0 0.0
    %95 = vmatprep.mubr.f32.mxu0 0.0
    %96 = vmatmul.mubr.f32.gmra.mrb[0].mxu0 %v29
    %v97 = vpop.f32.mrb[0].mxu0
    %v98 = vadd.f32 %v25, %v97
    %v99 = vpop.f32.mrb[0].mxu0
    %100 = vdwg.mxu0
    %vm101 = vcmask 64512
    %102 = vst.msk [vmem:[#allocation2] sm:$0xff] %vm101, %v98
    // Predicated region
    $region14: #{tpu_custom_call.1} parent=1 // pred_check
      _
    $region15: #{tpu_custom_call.1} parent=1 // pred_check_branch
      %104 = sbr.rel (0) target = $region17
    $region16: #{tpu_custom_call.1} parent=1 // pred_region
      %s106 = ssub.s32 128, 128
      %107 = vsyncadd [#allocation3], %s106
      %s109 = sshll.u32 [#allocation2], 4
      %s110 = int_to_ptr.vmem [resolvable:$true] %s109
      %112 = dma.vmem_to_hbm [thread:$0]  %s110, 128, %s3, [#allocation3]
    $region17: #{tpu_custom_call.1} parent=1 // pred_fallthru
      _
    // Predicated region
    $region18: #{tpu_custom_call.1} parent=1 // pred_check
      _
    $region19: #{tpu_custom_call.1} parent=1 // pred_check_branch
      %114 = sbr.rel (0) target = $region21
    $region20: #{tpu_custom_call.1} parent=1 // pred_region
      %115 = dma.done [#allocation3], 128
    $region21: #{tpu_custom_call.1} parent=1 // pred_fallthru
      _
    %116 = vsyncpa [#allocation3], 1

</llo_original>
